<compile_context>
chip_gen: v5e
topology: v5e:2x2
jax: 0.10.0
libtpu: 0.0.40
codegen_flags: <defaults>
</compile_context>

<pallas_src>
import functools

import jax
import jax.numpy as jnp
from jax.experimental import pallas as pl
from jax.experimental.pallas import tpu as pltpu

KSIZE = 5
PAD = 2


def _round_up(v, m):
    return (v + m - 1) // m * m


def _largest_divisor_leq(n, cap):
    cap = max(1, min(n, cap))
    for d in range(cap, 0, -1):
        if n % d == 0:
            return d
    return 1


def _spatial_attn_kernel(w_ref, b_ref, x_ref, o_ref,
                         sum_ref, max_ref, pad_ref, *, inv_c):
    # w_ref: (5, 5) f32 SMEM;  b_ref: (1,) f32 SMEM
    # x_ref: (TB, CB, H, W) VMEM block;  o_ref: (TB, 1, H, W) VMEM block
    # sum_ref / max_ref: (TB, H, W) f32 running channel sum / channel max
    # pad_ref: (TB, Hp, Wp) f32 tile-aligned zero-padded scratch for the conv
    k = pl.program_id(1)
    nk = pl.num_programs(1)

    @pl.when(k == 0)
    def _init():
        sum_ref[...] = jnp.zeros_like(sum_ref)
        max_ref[...] = jnp.full_like(max_ref, -jnp.inf)

    x = x_ref[...].astype(jnp.float32)               # (TB, CB, H, W)
    sum_ref[...] = sum_ref[...] + jnp.sum(x, axis=1)
    max_ref[...] = jnp.maximum(max_ref[...], jnp.max(x, axis=1))

    @pl.when(k == nk - 1)
    def _finalize():
        s = sum_ref[...] * inv_c + max_ref[...]      # (TB, H, W) = avg + max
        tb, h, w = s.shape

        # Tile-aligned padded scratch: zero it, write s into the interior.
        pad_ref[...] = jnp.zeros_like(pad_ref)
        pad_ref[:, PAD:PAD + h, PAD:PAD + w] = s
        padded = pad_ref[...]                        # (TB, Hp, Wp)

        # Hoist the 5 lane shifts (dj); reuse across the 5 sublane shifts (di).
        cols = [padded[:, :, dj:dj + w] for dj in range(KSIZE)]  # (TB, Hp, W)

        # 5 independent partial accumulators -> short dependency chains.
        partials = []
        for dj in range(KSIZE):
            p = w_ref[0, dj] * cols[dj][:, 0:h, :]
            for di in range(1, KSIZE):
                p = p + w_ref[di, dj] * cols[dj][:, di:di + h, :]
            partials.append(p)
        acc = ((partials[0] + partials[1]) + (partials[2] + partials[3])
               + partials[4])
        acc = acc + b_ref[0]

        o_ref[:, 0, :, :] = jax.nn.sigmoid(acc).astype(o_ref.dtype)


def spatial_attention_module2(x, weight, bias, *,
                              block_budget_bytes=2 * 1024 * 1024):
    """x: (N, C, H, W); weight: (5, 5); bias: (1,) -> (N, 1, H, W)."""
    n, c, h, w = x.shape
    itemsize = jnp.dtype(x.dtype).itemsize
    per_image_bytes = c * h * w * itemsize

    # Batch several images per grid step (big DMA slabs), but keep >= 2 batch
    # steps when possible so the parallel axis can use both v7x TensorCores.
    tb_cap = max(1, block_budget_bytes // max(per_image_bytes, 1))
    if n >= 2:
        tb_cap = min(tb_cap, (n + 1) // 2)
    tb = _largest_divisor_leq(n, tb_cap)

    # For large C*H*W, tile channels along a trailing "arbitrary" axis with
    # running sum/max accumulators, bounding VMEM use per step.
    if per_image_bytes > block_budget_bytes:
        tb = 1
        cb_cap = max(1, block_budget_bytes // max(h * w * itemsize, 1))
        c_blk = _largest_divisor_leq(c, cb_cap)
    else:
        c_blk = c
    # TODO(synk): very large single planes (H*W alone over budget) would also
    # need spatial tiling with a 2-pixel halo; not implemented here.

    n_b = n // tb
    n_k = c // c_blk

    hp = _round_up(h + 2 * PAD, 8)
    wp = _round_up(w + 2 * PAD, 128)

    weight = weight.astype(jnp.float32)
    bias = bias.astype(jnp.float32)

    in_block = tb * c_blk * h * w * itemsize
    out_block = tb * h * w * itemsize
    scratch_bytes = (2 * tb * h * w + tb * hp * wp) * 4
    vmem_limit = int(min(max(2 * (in_block + out_block) + scratch_bytes
                             + (1 << 20), 4 << 20), 32 << 20))

    cost = pl.CostEstimate(
        flops=int(n * h * w * (2 * c + 2 * KSIZE * KSIZE)),
        transcendentals=int(n * h * w),
        bytes_accessed=int(n * c * h * w * itemsize + n * h * w * itemsize),
    )

    kernel = functools.partial(_spatial_attn_kernel, inv_c=1.0 / c)

    return pl.pallas_call(
        kernel,
        out_shape=jax.ShapeDtypeStruct((n, 1, h, w), x.dtype),
        grid=(n_b, n_k),
        in_specs=[
            pl.BlockSpec(memory_space=pltpu.MemorySpace.SMEM),   # conv weight
            pl.BlockSpec(memory_space=pltpu.MemorySpace.SMEM),   # conv bias
            pl.BlockSpec((tb, c_blk, h, w), lambda i, k: (i, k, 0, 0)),
        ],
        out_specs=pl.BlockSpec((tb, 1, h, w), lambda i, k: (i, 0, 0, 0)),
        scratch_shapes=[
            pltpu.VMEM((tb, h, w), jnp.float32),     # running channel sum
            pltpu.VMEM((tb, h, w), jnp.float32),     # running channel max
            pltpu.VMEM((tb, hp, wp), jnp.float32),   # padded conv scratch
        ],
        compiler_params=pltpu.CompilerParams(
            dimension_semantics=("parallel", "arbitrary"),
            vmem_limit_bytes=vmem_limit),
        cost_estimate=cost,
    )(weight, bias, x)


def _reference(x, weight, bias):
    avg = jnp.mean(x, axis=1, keepdims=True)
    mx = jnp.max(x, axis=1, keepdims=True)
    s = (avg + mx).astype(jnp.float32)
    out = jax.lax.conv_general_dilated(
        s, weight.reshape(1, 1, KSIZE, KSIZE).astype(jnp.float32),
        window_strides=(1, 1), padding=((PAD, PAD), (PAD, PAD)),
        dimension_numbers=("NCHW", "OIHW", "NCHW"))
    return jax.nn.sigmoid(out + bias.reshape(1, 1, 1, 1)).astype(x.dtype)


if __name__ == "__main__":
    key = jax.random.PRNGKey(0)
    kx, kw, kb = jax.random.split(key, 3)

    N, C, H, W = 2, 4, 16, 16
    x = jax.random.normal(kx, (N, C, H, W), dtype=jnp.float32)

    # Deterministic Conv2d(1, 1, kernel_size=5) params.
    fan_in = 1 * KSIZE * KSIZE
    bound = 1.0 / (fan_in ** 0.5)
    weight = jax.random.uniform(kw, (KSIZE, KSIZE), jnp.float32, -bound, bound)
    bias = jax.random.uniform(kb, (1,), jnp.float32, -bound, bound)

    out = spatial_attention_module2(x, weight, bias)
    out = jax.block_until_ready(out)

    ref = _reference(x, weight, bias)
    assert out.shape == (N, 1, H, W)
    assert jnp.allclose(out, ref, atol=1e-5, rtol=1e-5)

    print("KERNEL_OK")
</pallas_src>

<mosaic_0001>
module attributes {stable_mosaic.version = 11 : i64} {
  func.func @_spatial_attn_kernel(%arg0: i32, %arg1: i32, %arg2: memref<5x5xf32, #tpu.memory_space<smem>>, %arg3: memref<1xf32, #tpu.memory_space<smem>>, %arg4: memref<1x4x16x16xf32, #tpu.memory_space<vmem>>, %arg5: memref<1x1x16x16xf32, #tpu.memory_space<vmem>>, %arg6: memref<1x16x16xf32, #tpu.memory_space<vmem>>, %arg7: memref<1x16x16xf32, #tpu.memory_space<vmem>>, %arg8: memref<1x24x128xf32, #tpu.memory_space<vmem>>) attributes {dimension_semantics = [#tpu.dimension_semantics<parallel>, #tpu.dimension_semantics<arbitrary>], iteration_bounds = array<i64: 2, 1>, scalar_prefetch = 0 : i64, scratch_operands = 3 : i64, tpu.core_type = #tpu.core_type<tc>, window_params = [{transform_indices = @transform_0, window_bounds = array<i64: 5, 5>}, {transform_indices = @transform_1, window_bounds = array<i64: 1>}, {transform_indices = @transform_2, window_bounds = array<i64: 1, 4, 16, 16>}, {transform_indices = @transform_3, window_bounds = array<i64: 1, 1, 16, 16>}]} {
    %c0_i32 = arith.constant 0 : i32
    %0 = arith.cmpi eq, %arg1, %c0_i32 : i32
    %1 = arith.extui %0 : i1 to i32
    %c0_i32_0 = arith.constant 0 : i32
    %2 = arith.cmpi ne, %1, %c0_i32_0 : i32
    scf.if %2 {
      %cst_19 = arith.constant 0.000000e+00 : f32
      %15 = vector.broadcast %cst_19 : f32 to vector<1x16x16xf32>
      %c0_20 = arith.constant 0 : index
      %c0_21 = arith.constant 0 : index
      %c0_22 = arith.constant 0 : index
      %16 = vector.load %arg6[%c0_20, %c0_21, %c0_22] : memref<1x16x16xf32, #tpu.memory_space<vmem>>, vector<1x16x16xf32>
      tpu.vector_store %arg6[%c0_20, %c0_21, %c0_22], %15 {strides = array<i32>} : memref<1x16x16xf32, #tpu.memory_space<vmem>>, vector<1x16x16xf32>,
      %cst_23 = arith.constant 0xFF800000 : f32
      %17 = vector.broadcast %cst_23 : f32 to vector<1x16x16xf32>
      %c0_24 = arith.constant 0 : index
      %c0_25 = arith.constant 0 : index
      %c0_26 = arith.constant 0 : index
      %18 = vector.load %arg7[%c0_24, %c0_25, %c0_26] : memref<1x16x16xf32, #tpu.memory_space<vmem>>, vector<1x16x16xf32>
      tpu.vector_store %arg7[%c0_24, %c0_25, %c0_26], %17 {strides = array<i32>} : memref<1x16x16xf32, #tpu.memory_space<vmem>>, vector<1x16x16xf32>,
    } else {
    }
    %c0 = arith.constant 0 : index
    %c0_1 = arith.constant 0 : index
    %c0_2 = arith.constant 0 : index
    %c0_3 = arith.constant 0 : index
    %3 = vector.load %arg4[%c0, %c0_1, %c0_2, %c0_3] : memref<1x4x16x16xf32, #tpu.memory_space<vmem>>, vector<1x4x16x16xf32>
    %c0_4 = arith.constant 0 : index
    %c0_5 = arith.constant 0 : index
    %c0_6 = arith.constant 0 : index
    %4 = vector.load %arg6[%c0_4, %c0_5, %c0_6] : memref<1x16x16xf32, #tpu.memory_space<vmem>>, vector<1x16x16xf32>
    %cst = arith.constant dense<0.000000e+00> : vector<1x16x16xf32>
    %5 = vector.multi_reduction <add>, %3, %cst [1] : vector<1x4x16x16xf32> to vector<1x16x16xf32>
    %6 = arith.addf %4, %5 : vector<1x16x16xf32>
    %c0_7 = arith.constant 0 : index
    %c0_8 = arith.constant 0 : index
    %c0_9 = arith.constant 0 : index
    %7 = vector.load %arg6[%c0_7, %c0_8, %c0_9] : memref<1x16x16xf32, #tpu.memory_space<vmem>>, vector<1x16x16xf32>
    tpu.vector_store %arg6[%c0_7, %c0_8, %c0_9], %6 {strides = array<i32>} : memref<1x16x16xf32, #tpu.memory_space<vmem>>, vector<1x16x16xf32>,
    %c0_10 = arith.constant 0 : index
    %c0_11 = arith.constant 0 : index
    %c0_12 = arith.constant 0 : index
    %8 = vector.load %arg7[%c0_10, %c0_11, %c0_12] : memref<1x16x16xf32, #tpu.memory_space<vmem>>, vector<1x16x16xf32>
    %cst_13 = arith.constant dense<0xFF800000> : vector<1x16x16xf32>
    %9 = vector.multi_reduction <maximumf>, %3, %cst_13 [1] : vector<1x4x16x16xf32> to vector<1x16x16xf32>
    %10 = arith.maximumf %8, %9 : vector<1x16x16xf32>
    %c0_14 = arith.constant 0 : index
    %c0_15 = arith.constant 0 : index
    %c0_16 = arith.constant 0 : index
    %11 = vector.load %arg7[%c0_14, %c0_15, %c0_16] : memref<1x16x16xf32, #tpu.memory_space<vmem>>, vector<1x16x16xf32>
    tpu.vector_store %arg7[%c0_14, %c0_15, %c0_16], %10 {strides = array<i32>} : memref<1x16x16xf32, #tpu.memory_space<vmem>>, vector<1x16x16xf32>,
    %c0_i32_17 = arith.constant 0 : i32
    %12 = arith.cmpi eq, %arg1, %c0_i32_17 : i32
    %13 = arith.extui %12 : i1 to i32
    %c0_i32_18 = arith.constant 0 : i32
    %14 = arith.cmpi ne, %13, %c0_i32_18 : i32
    scf.if %14 {
      %c0_19 = arith.constant 0 : index
      %c0_20 = arith.constant 0 : index
      %c0_21 = arith.constant 0 : index
      %15 = vector.load %arg6[%c0_19, %c0_20, %c0_21] : memref<1x16x16xf32, #tpu.memory_space<vmem>>, vector<1x16x16xf32>
      %cst_22 = arith.constant 2.500000e-01 : f32
      %16 = vector.broadcast %cst_22 : f32 to vector<1x16x16xf32>
      %17 = arith.mulf %15, %16 : vector<1x16x16xf32>
      %c0_23 = arith.constant 0 : index
      %c0_24 = arith.constant 0 : index
      %c0_25 = arith.constant 0 : index
      %18 = vector.load %arg7[%c0_23, %c0_24, %c0_25] : memref<1x16x16xf32, #tpu.memory_space<vmem>>, vector<1x16x16xf32>
      %19 = arith.addf %17, %18 : vector<1x16x16xf32>
      %cst_26 = arith.constant 0.000000e+00 : f32
      %20 = vector.broadcast %cst_26 : f32 to vector<1x24x128xf32>
      %c0_27 = arith.constant 0 : index
      %c0_28 = arith.constant 0 : index
      %c0_29 = arith.constant 0 : index
      %21 = vector.load %arg8[%c0_27, %c0_28, %c0_29] : memref<1x24x128xf32, #tpu.memory_space<vmem>>, vector<1x24x128xf32>
      tpu.vector_store %arg8[%c0_27, %c0_28, %c0_29], %20 {strides = array<i32>} : memref<1x24x128xf32, #tpu.memory_space<vmem>>, vector<1x24x128xf32>,
      %c0_30 = arith.constant 0 : index
      %c2 = arith.constant 2 : index
      %c2_31 = arith.constant 2 : index
      %22 = vector.load %arg8[%c0_30, %c2, %c2_31] : memref<1x24x128xf32, #tpu.memory_space<vmem>>, vector<1x16x16xf32>
      tpu.vector_store %arg8[%c0_30, %c2, %c2_31], %19 {strides = array<i32>} : memref<1x24x128xf32, #tpu.memory_space<vmem>>, vector<1x16x16xf32>,
      %c0_32 = arith.constant 0 : index
      %c0_33 = arith.constant 0 : index
      %c0_34 = arith.constant 0 : index
      %23 = vector.load %arg8[%c0_32, %c0_33, %c0_34] : memref<1x24x128xf32, #tpu.memory_space<vmem>>, vector<1x24x128xf32>
      %24 = vector.extract_strided_slice %23 {offsets = [0, 0, 0], sizes = [1, 24, 16], strides = [1, 1, 1]} : vector<1x24x128xf32> to vector<1x24x16xf32>
      %25 = vector.extract_strided_slice %23 {offsets = [0, 0, 1], sizes = [1, 24, 16], strides = [1, 1, 1]} : vector<1x24x128xf32> to vector<1x24x16xf32>
      %26 = vector.extract_strided_slice %23 {offsets = [0, 0, 2], sizes = [1, 24, 16], strides = [1, 1, 1]} : vector<1x24x128xf32> to vector<1x24x16xf32>
      %27 = vector.extract_strided_slice %23 {offsets = [0, 0, 3], sizes = [1, 24, 16], strides = [1, 1, 1]} : vector<1x24x128xf32> to vector<1x24x16xf32>
      %28 = vector.extract_strided_slice %23 {offsets = [0, 0, 4], sizes = [1, 24, 16], strides = [1, 1, 1]} : vector<1x24x128xf32> to vector<1x24x16xf32>
      %c0_35 = arith.constant 0 : index
      %c0_36 = arith.constant 0 : index
      %29 = memref.load %arg2[%c0_35, %c0_36] : memref<5x5xf32, #tpu.memory_space<smem>>
      %30 = vector.extract_strided_slice %24 {offsets = [0, 0, 0], sizes = [1, 16, 16], strides = [1, 1, 1]} : vector<1x24x16xf32> to vector<1x16x16xf32>
      %31 = vector.broadcast %29 : f32 to vector<1x16x16xf32>
      %32 = arith.mulf %31, %30 : vector<1x16x16xf32>
      %c1 = arith.constant 1 : index
      %c0_37 = arith.constant 0 : index
      %33 = memref.load %arg2[%c1, %c0_37] : memref<5x5xf32, #tpu.memory_space<smem>>
      %34 = vector.extract_strided_slice %24 {offsets = [0, 1, 0], sizes = [1, 16, 16], strides = [1, 1, 1]} : vector<1x24x16xf32> to vector<1x16x16xf32>
      %35 = vector.broadcast %33 : f32 to vector<1x16x16xf32>
      %36 = arith.mulf %35, %34 : vector<1x16x16xf32>
      %37 = arith.addf %32, %36 : vector<1x16x16xf32>
      %c2_38 = arith.constant 2 : index
      %c0_39 = arith.constant 0 : index
      %38 = memref.load %arg2[%c2_38, %c0_39] : memref<5x5xf32, #tpu.memory_space<smem>>
      %39 = vector.extract_strided_slice %24 {offsets = [0, 2, 0], sizes = [1, 16, 16], strides = [1, 1, 1]} : vector<1x24x16xf32> to vector<1x16x16xf32>
      %40 = vector.broadcast %38 : f32 to vector<1x16x16xf32>
      %41 = arith.mulf %40, %39 : vector<1x16x16xf32>
      %42 = arith.addf %37, %41 : vector<1x16x16xf32>
      %c3 = arith.constant 3 : index
      %c0_40 = arith.constant 0 : index
      %43 = memref.load %arg2[%c3, %c0_40] : memref<5x5xf32, #tpu.memory_space<smem>>
      %44 = vector.extract_strided_slice %24 {offsets = [0, 3, 0], sizes = [1, 16, 16], strides = [1, 1, 1]} : vector<1x24x16xf32> to vector<1x16x16xf32>
      %45 = vector.broadcast %43 : f32 to vector<1x16x16xf32>
      %46 = arith.mulf %45, %44 : vector<1x16x16xf32>
      %47 = arith.addf %42, %46 : vector<1x16x16xf32>
      %c4 = arith.constant 4 : index
      %c0_41 = arith.constant 0 : index
      %48 = memref.load %arg2[%c4, %c0_41] : memref<5x5xf32, #tpu.memory_space<smem>>
      %49 = vector.extract_strided_slice %24 {offsets = [0, 4, 0], sizes = [1, 16, 16], strides = [1, 1, 1]} : vector<1x24x16xf32> to vector<1x16x16xf32>
      %50 = vector.broadcast %48 : f32 to vector<1x16x16xf32>
      %51 = arith.mulf %50, %49 : vector<1x16x16xf32>
      %52 = arith.addf %47, %51 : vector<1x16x16xf32>
      %c0_42 = arith.constant 0 : index
      %c1_43 = arith.constant 1 : index
      %53 = memref.load %arg2[%c0_42, %c1_43] : memref<5x5xf32, #tpu.memory_space<smem>>
      %54 = vector.extract_strided_slice %25 {offsets = [0, 0, 0], sizes = [1, 16, 16], strides = [1, 1, 1]} : vector<1x24x16xf32> to vector<1x16x16xf32>
      %55 = vector.broadcast %53 : f32 to vector<1x16x16xf32>
      %56 = arith.mulf %55, %54 : vector<1x16x16xf32>
      %c1_44 = arith.constant 1 : index
      %c1_45 = arith.constant 1 : index
      %57 = memref.load %arg2[%c1_44, %c1_45] : memref<5x5xf32, #tpu.memory_space<smem>>
      %58 = vector.extract_strided_slice %25 {offsets = [0, 1, 0], sizes = [1, 16, 16], strides = [1, 1, 1]} : vector<1x24x16xf32> to vector<1x16x16xf32>
      %59 = vector.broadcast %57 : f32 to vector<1x16x16xf32>
      %60 = arith.mulf %59, %58 : vector<1x16x16xf32>
      %61 = arith.addf %56, %60 : vector<1x16x16xf32>
      %c2_46 = arith.constant 2 : index
      %c1_47 = arith.constant 1 : index
      %62 = memref.load %arg2[%c2_46, %c1_47] : memref<5x5xf32, #tpu.memory_space<smem>>
      %63 = vector.extract_strided_slice %25 {offsets = [0, 2, 0], sizes = [1, 16, 16], strides = [1, 1, 1]} : vector<1x24x16xf32> to vector<1x16x16xf32>
      %64 = vector.broadcast %62 : f32 to vector<1x16x16xf32>
      %65 = arith.mulf %64, %63 : vector<1x16x16xf32>
      %66 = arith.addf %61, %65 : vector<1x16x16xf32>
      %c3_48 = arith.constant 3 : index
      %c1_49 = arith.constant 1 : index
      %67 = memref.load %arg2[%c3_48, %c1_49] : memref<5x5xf32, #tpu.memory_space<smem>>
      %68 = vector.extract_strided_slice %25 {offsets = [0, 3, 0], sizes = [1, 16, 16], strides = [1, 1, 1]} : vector<1x24x16xf32> to vector<1x16x16xf32>
      %69 = vector.broadcast %67 : f32 to vector<1x16x16xf32>
      %70 = arith.mulf %69, %68 : vector<1x16x16xf32>
      %71 = arith.addf %66, %70 : vector<1x16x16xf32>
      %c4_50 = arith.constant 4 : index
      %c1_51 = arith.constant 1 : index
      %72 = memref.load %arg2[%c4_50, %c1_51] : memref<5x5xf32, #tpu.memory_space<smem>>
      %73 = vector.extract_strided_slice %25 {offsets = [0, 4, 0], sizes = [1, 16, 16], strides = [1, 1, 1]} : vector<1x24x16xf32> to vector<1x16x16xf32>
      %74 = vector.broadcast %72 : f32 to vector<1x16x16xf32>
      %75 = arith.mulf %74, %73 : vector<1x16x16xf32>
      %76 = arith.addf %71, %75 : vector<1x16x16xf32>
      %c0_52 = arith.constant 0 : index
      %c2_53 = arith.constant 2 : index
      %77 = memref.load %arg2[%c0_52, %c2_53] : memref<5x5xf32, #tpu.memory_space<smem>>
      %78 = vector.extract_strided_slice %26 {offsets = [0, 0, 0], sizes = [1, 16, 16], strides = [1, 1, 1]} : vector<1x24x16xf32> to vector<1x16x16xf32>
      %79 = vector.broadcast %77 : f32 to vector<1x16x16xf32>
      %80 = arith.mulf %79, %78 : vector<1x16x16xf32>
      %c1_54 = arith.constant 1 : index
      %c2_55 = arith.constant 2 : index
      %81 = memref.load %arg2[%c1_54, %c2_55] : memref<5x5xf32, #tpu.memory_space<smem>>
      %82 = vector.extract_strided_slice %26 {offsets = [0, 1, 0], sizes = [1, 16, 16], strides = [1, 1, 1]} : vector<1x24x16xf32> to vector<1x16x16xf32>
      %83 = vector.broadcast %81 : f32 to vector<1x16x16xf32>
      %84 = arith.mulf %83, %82 : vector<1x16x16xf32>
      %85 = arith.addf %80, %84 : vector<1x16x16xf32>
      %c2_56 = arith.constant 2 : index
      %c2_57 = arith.constant 2 : index
      %86 = memref.load %arg2[%c2_56, %c2_57] : memref<5x5xf32, #tpu.memory_space<smem>>
      %87 = vector.extract_strided_slice %26 {offsets = [0, 2, 0], sizes = [1, 16, 16], strides = [1, 1, 1]} : vector<1x24x16xf32> to vector<1x16x16xf32>
      %88 = vector.broadcast %86 : f32 to vector<1x16x16xf32>
      %89 = arith.mulf %88, %87 : vector<1x16x16xf32>
      %90 = arith.addf %85, %89 : vector<1x16x16xf32>
      %c3_58 = arith.constant 3 : index
      %c2_59 = arith.constant 2 : index
      %91 = memref.load %arg2[%c3_58, %c2_59] : memref<5x5xf32, #tpu.memory_space<smem>>
      %92 = vector.extract_strided_slice %26 {offsets = [0, 3, 0], sizes = [1, 16, 16], strides = [1, 1, 1]} : vector<1x24x16xf32> to vector<1x16x16xf32>
      %93 = vector.broadcast %91 : f32 to vector<1x16x16xf32>
      %94 = arith.mulf %93, %92 : vector<1x16x16xf32>
      %95 = arith.addf %90, %94 : vector<1x16x16xf32>
      %c4_60 = arith.constant 4 : index
      %c2_61 = arith.constant 2 : index
      %96 = memref.load %arg2[%c4_60, %c2_61] : memref<5x5xf32, #tpu.memory_space<smem>>
      %97 = vector.extract_strided_slice %26 {offsets = [0, 4, 0], sizes = [1, 16, 16], strides = [1, 1, 1]} : vector<1x24x16xf32> to vector<1x16x16xf32>
      %98 = vector.broadcast %96 : f32 to vector<1x16x16xf32>
      %99 = arith.mulf %98, %97 : vector<1x16x16xf32>
      %100 = arith.addf %95, %99 : vector<1x16x16xf32>
      %c0_62 = arith.constant 0 : index
      %c3_63 = arith.constant 3 : index
      %101 = memref.load %arg2[%c0_62, %c3_63] : memref<5x5xf32, #tpu.memory_space<smem>>
      %102 = vector.extract_strided_slice %27 {offsets = [0, 0, 0], sizes = [1, 16, 16], strides = [1, 1, 1]} : vector<1x24x16xf32> to vector<1x16x16xf32>
      %103 = vector.broadcast %101 : f32 to vector<1x16x16xf32>
      %104 = arith.mulf %103, %102 : vector<1x16x16xf32>
      %c1_64 = arith.constant 1 : index
      %c3_65 = arith.constant 3 : index
      %105 = memref.load %arg2[%c1_64, %c3_65] : memref<5x5xf32, #tpu.memory_space<smem>>
      %106 = vector.extract_strided_slice %27 {offsets = [0, 1, 0], sizes = [1, 16, 16], strides = [1, 1, 1]} : vector<1x24x16xf32> to vector<1x16x16xf32>
      %107 = vector.broadcast %105 : f32 to vector<1x16x16xf32>
      %108 = arith.mulf %107, %106 : vector<1x16x16xf32>
      %109 = arith.addf %104, %108 : vector<1x16x16xf32>
      %c2_66 = arith.constant 2 : index
      %c3_67 = arith.constant 3 : index
      %110 = memref.load %arg2[%c2_66, %c3_67] : memref<5x5xf32, #tpu.memory_space<smem>>
      %111 = vector.extract_strided_slice %27 {offsets = [0, 2, 0], sizes = [1, 16, 16], strides = [1, 1, 1]} : vector<1x24x16xf32> to vector<1x16x16xf32>
      %112 = vector.broadcast %110 : f32 to vector<1x16x16xf32>
      %113 = arith.mulf %112, %111 : vector<1x16x16xf32>
      %114 = arith.addf %109, %113 : vector<1x16x16xf32>
      %c3_68 = arith.constant 3 : index
      %c3_69 = arith.constant 3 : index
      %115 = memref.load %arg2[%c3_68, %c3_69] : memref<5x5xf32, #tpu.memory_space<smem>>
      %116 = vector.extract_strided_slice %27 {offsets = [0, 3, 0], sizes = [1, 16, 16], strides = [1, 1, 1]} : vector<1x24x16xf32> to vector<1x16x16xf32>
      %117 = vector.broadcast %115 : f32 to vector<1x16x16xf32>
      %118 = arith.mulf %117, %116 : vector<1x16x16xf32>
      %119 = arith.addf %114, %118 : vector<1x16x16xf32>
      %c4_70 = arith.constant 4 : index
      %c3_71 = arith.constant 3 : index
      %120 = memref.load %arg2[%c4_70, %c3_71] : memref<5x5xf32, #tpu.memory_space<smem>>
      %121 = vector.extract_strided_slice %27 {offsets = [0, 4, 0], sizes = [1, 16, 16], strides = [1, 1, 1]} : vector<1x24x16xf32> to vector<1x16x16xf32>
      %122 = vector.broadcast %120 : f32 to vector<1x16x16xf32>
      %123 = arith.mulf %122, %121 : vector<1x16x16xf32>
      %124 = arith.addf %119, %123 : vector<1x16x16xf32>
      %c0_72 = arith.constant 0 : index
      %c4_73 = arith.constant 4 : index
      %125 = memref.load %arg2[%c0_72, %c4_73] : memref<5x5xf32, #tpu.memory_space<smem>>
      %126 = vector.extract_strided_slice %28 {offsets = [0, 0, 0], sizes = [1, 16, 16], strides = [1, 1, 1]} : vector<1x24x16xf32> to vector<1x16x16xf32>
      %127 = vector.broadcast %125 : f32 to vector<1x16x16xf32>
      %128 = arith.mulf %127, %126 : vector<1x16x16xf32>
      %c1_74 = arith.constant 1 : index
      %c4_75 = arith.constant 4 : index
      %129 = memref.load %arg2[%c1_74, %c4_75] : memref<5x5xf32, #tpu.memory_space<smem>>
      %130 = vector.extract_strided_slice %28 {offsets = [0, 1, 0], sizes = [1, 16, 16], strides = [1, 1, 1]} : vector<1x24x16xf32> to vector<1x16x16xf32>
      %131 = vector.broadcast %129 : f32 to vector<1x16x16xf32>
      %132 = arith.mulf %131, %130 : vector<1x16x16xf32>
      %133 = arith.addf %128, %132 : vector<1x16x16xf32>
      %c2_76 = arith.constant 2 : index
      %c4_77 = arith.constant 4 : index
      %134 = memref.load %arg2[%c2_76, %c4_77] : memref<5x5xf32, #tpu.memory_space<smem>>
      %135 = vector.extract_strided_slice %28 {offsets = [0, 2, 0], sizes = [1, 16, 16], strides = [1, 1, 1]} : vector<1x24x16xf32> to vector<1x16x16xf32>
      %136 = vector.broadcast %134 : f32 to vector<1x16x16xf32>
      %137 = arith.mulf %136, %135 : vector<1x16x16xf32>
      %138 = arith.addf %133, %137 : vector<1x16x16xf32>
      %c3_78 = arith.constant 3 : index
      %c4_79 = arith.constant 4 : index
      %139 = memref.load %arg2[%c3_78, %c4_79] : memref<5x5xf32, #tpu.memory_space<smem>>
      %140 = vector.extract_strided_slice %28 {offsets = [0, 3, 0], sizes = [1, 16, 16], strides = [1, 1, 1]} : vector<1x24x16xf32> to vector<1x16x16xf32>
      %141 = vector.broadcast %139 : f32 to vector<1x16x16xf32>
      %142 = arith.mulf %141, %140 : vector<1x16x16xf32>
      %143 = arith.addf %138, %142 : vector<1x16x16xf32>
      %c4_80 = arith.constant 4 : index
      %c4_81 = arith.constant 4 : index
      %144 = memref.load %arg2[%c4_80, %c4_81] : memref<5x5xf32, #tpu.memory_space<smem>>
      %145 = vector.extract_strided_slice %28 {offsets = [0, 4, 0], sizes = [1, 16, 16], strides = [1, 1, 1]} : vector<1x24x16xf32> to vector<1x16x16xf32>
      %146 = vector.broadcast %144 : f32 to vector<1x16x16xf32>
      %147 = arith.mulf %146, %145 : vector<1x16x16xf32>
      %148 = arith.addf %143, %147 : vector<1x16x16xf32>
      %149 = arith.addf %52, %76 : vector<1x16x16xf32>
      %150 = arith.addf %100, %124 : vector<1x16x16xf32>
      %151 = arith.addf %149, %150 : vector<1x16x16xf32>
      %152 = arith.addf %151, %148 : vector<1x16x16xf32>
      %c0_82 = arith.constant 0 : index
      %153 = memref.load %arg3[%c0_82] : memref<1xf32, #tpu.memory_space<smem>>
      %154 = vector.broadcast %153 : f32 to vector<1x16x16xf32>
      %155 = arith.addf %152, %154 : vector<1x16x16xf32>
      %156 = arith.negf %155 : vector<1x16x16xf32>
      %157 = math.exp %156 : vector<1x16x16xf32>
      %cst_83 = arith.constant 1.000000e+00 : f32
      %158 = vector.broadcast %cst_83 : f32 to vector<1x16x16xf32>
      %159 = arith.addf %158, %157 : vector<1x16x16xf32>
      %160 = arith.divf %158, %159 : vector<1x16x16xf32>
      %c0_84 = arith.constant 0 : index
      %c0_85 = arith.constant 0 : index
      %c0_86 = arith.constant 0 : index
      %c0_87 = arith.constant 0 : index
      %161 = vector.load %arg5[%c0_84, %c0_85, %c0_86, %c0_87] : memref<1x1x16x16xf32, #tpu.memory_space<vmem>>, vector<1x1x16x16xf32>
      %162 = vector.shape_cast %161 : vector<1x1x16x16xf32> to vector<1x16x16xf32>
      %163 = vector.shape_cast %160 : vector<1x16x16xf32> to vector<1x1x16x16xf32>
      tpu.vector_store %arg5[%c0_84, %c0_85, %c0_86, %c0_87], %163 {strides = array<i32>} : memref<1x1x16x16xf32, #tpu.memory_space<vmem>>, vector<1x1x16x16xf32>,
    } else {
    }
    return
  }
  func.func @transform_0(%arg0: i32, %arg1: i32) -> (i32, i32) {
    %c0_i32 = arith.constant 0 : i32
    %c0_i32_0 = arith.constant 0 : i32
    %c0_i32_1 = arith.constant 0 : i32
    return %c0_i32, %c0_i32_0 : i32, i32
  }
  func.func @transform_1(%arg0: i32, %arg1: i32) -> i32 {
    %c0_i32 = arith.constant 0 : i32
    %c0_i32_0 = arith.constant 0 : i32
    return %c0_i32 : i32
  }
  func.func @transform_2(%arg0: i32, %arg1: i32) -> (i32, i32, i32, i32) {
    %c0_i32 = arith.constant 0 : i32
    %c0_i32_0 = arith.constant 0 : i32
    %c0_i32_1 = arith.constant 0 : i32
    return %arg0, %arg1, %c0_i32, %c0_i32_0 : i32, i32, i32, i32
  }
  func.func @transform_3(%arg0: i32, %arg1: i32) -> (i32, i32, i32, i32) {
    %c0_i32 = arith.constant 0 : i32
    %c0_i32_0 = arith.constant 0 : i32
    %c0_i32_1 = arith.constant 0 : i32
    %c0_i32_2 = arith.constant 0 : i32
    return %arg0, %c0_i32, %c0_i32_0, %c0_i32_1 : i32, i32, i32, i32
  }
}

</mosaic_0001>

<llo_original>
// kernel: tpu_custom_call.1
$region0: #{tpu_custom_call.1}
  #allocation0 [shape = 'u32[]', space=smem, size = 0x4, offset = 0x4, fixed_abs, tag = 'smem constant byte address 0x4 - core index']
  #allocation1 [shape = 'u32[72,128]{1,0:T(1,128)}', space=vmem, size = 0x9000, scoped, tag = 'internal scratch']
  #allocation2 [shape = 'f32[1,16,16]{2,1,0:T(8,128)}', space=vmem, size = 0x2000, scoped, tag = 'scratch operand']
  #allocation3 [shape = 'f32[1,16,16]{2,1,0:T(8,128)}', space=vmem, size = 0x2000, scoped, tag = 'scratch operand']
  #allocation4 [shape = 'f32[1,24,128]{2,1,0:T(8,128)}', space=vmem, size = 0x3000, scoped, tag = 'scratch operand']
  #allocation5 [shape = 'f32[1]{0:T(128)S(6)}', space=smem, size = 0x200, scoped, tag = 'scoped memory for tpu_custom_call.1']
  %s0 = inlined_call_operand.hbm [shape: f32[5,5], index: 0, kind: input, shape index: {}]
  %s1 = inlined_call_operand.<no memory space> [shape: f32[1], index: 1, kind: input, shape index: {}]
  %s2 = inlined_call_operand.hbm [shape: f32[2,4,16,16], index: 2, kind: input, shape index: {}]
  %s3 = inlined_call_operand.hbm [shape: f32[2,1,16,16], index: 3, kind: output, shape index: {}]
  %s4 = sld [smem:[#allocation0]]
  $region61: #{tpu_custom_call.1} parent=0
    _
  %s6 = ssub.s32 1, %s4
  %s7 = scalar_select 0, %s6, %s4
  %8 = sst [smem:[#allocation5]] %s1
  $region1: #{tpu_custom_call.1} parent=0
    #allocation6 [shape = 'u8[4096]{0}', space=smem, size = 0x1000, scoped, tag = 'input window, operand 0, single buffered']
    #allocation7 [shape = 's32[2]{0}', space=sflag, size = 0x8, scoped, tag = 'scoped memory for tpu_custom_call.1']
    #allocation8 [shape = 's32[2]{0}', space=sflag, size = 0x8, scoped, tag = 'scoped memory for tpu_custom_call.1']
    #allocation9 [shape = 's32[2]{0}', space=sflag, size = 0x8, scoped, tag = 'scoped memory for tpu_custom_call.1']
    #allocation10 [shape = 'u8[65536]{0}', space=vmem, size = 0x10000, scoped, tag = 'input window, operand 2']
    #allocation11 [shape = 'u8[16384]{0}', space=vmem, size = 0x4000, scoped, tag = 'output window, operand 0']
    %9 = vsyncpa [#allocation9], 0
    %10 = vsyncpa [#allocation7], 0
    %s11 = scalar_lea.sflag [#allocation7], 1
    %12 = vsyncpa %s11, 0
    %13 = vsyncpa [#allocation8], 0
    %s14 = scalar_lea.sflag [#allocation8], 1
    %15 = vsyncpa %s14, 0
    loop: start=0, step=1, limit=4
    $region2: #{tpu_custom_call.1} parent=1 // loop_pre_header
      _
    $region3: #{tpu_custom_call.1} parent=1 // loop_header
      %s17 = sphi 0, %s21
      %p18 = scmp.ge.s32.totalorder %s17, 4
      %s24 = sphi 0, %s36
      %s25 = sphi 0, %s32
      %s26 = sphi 0, %s24
      %s27 = sphi 0, %s25
      %s28 = sphi 0, %s26
      %s29 = sphi 0, %s27
      %s37 = sphi 0, %s37
      %s39 = sphi 0, %s37
      %s40 = sphi 0, %s39
      %s54 = sphi 0, %s40
      %s58 = sphi 0, %s58
      %s60 = sphi 0, %s58
      %s61 = sphi 0, %s60
      %s75 = sphi 0, %s61
      %s83 = sphi 0, %s85
      %s86 = sphi 0, %s83
      %s87 = sphi 0, %s86
      %s103 = sphi 0, %s87
      %s109 = sphi 0, %s111
      %s112 = sphi 0, %s109
      %s113 = sphi 0, %s112
      %s129 = sphi 0, %s113
    $region4: #{tpu_custom_call.1} parent=1 // loop_header_branch
      %20 = sbr.rel (%p18) target = $region8
    $region5: #{tpu_custom_call.1} parent=1 // loop_body
      %s22 = ssub.s32 %s17, 1
      %s23 = ssub.s32 %s17, 2
      %s30 = sadd.s32 1, %s25
      %p31 = scmp.ge.s32.totalorder %s30, 1
      %s32 = scalar_select %p31, 0, %s30
      %s33 = sadd.s32 1, %s24
      %s34 = scalar_select %p31, %s33, %s24
      %p35 = scmp.ge.s32.totalorder %s34, 2
      %s36 = scalar_select %p35, 0, %s34
      %s38 = sadd.s32 %s37, 1
      %p41 = scmp.eq.s32.totalorder %s17, 1
      %p42 = scmp.ne.s32.totalorder %s37, %s39
      %p43 = scmp.eq.s32.totalorder %s17, 0
      %p44 = por %p42, %p43
      %p45 = scmp.ne.s32.totalorder %s37, %s39
      %p46 = scmp.eq.s32.totalorder %s22, 1
      %p47 = por %p45, %p46
      %p48 = scmp.ne.s32.totalorder %s39, %s40
      %p49 = scmp.eq.s32.totalorder %s22, 0
      %p50 = por %p48, %p49
      %p51 = scmp.ne.s32.totalorder %s39, %s40
      %p52 = scmp.eq.s32.totalorder %s23, 1
      %p53 = por %p51, %p52
      %p55 = scmp.ne.s32.totalorder %s40, %s54
      %p56 = scmp.eq.s32.totalorder %s23, 0
      %p57 = por %p55, %p56
      %s59 = sadd.s32 %s58, 1
      %p62 = scmp.eq.s32.totalorder %s17, 1
      %p63 = scmp.ne.s32.totalorder %s58, %s60
      %p64 = scmp.eq.s32.totalorder %s17, 0
      %p65 = por %p63, %p64
      %p66 = scmp.ne.s32.totalorder %s58, %s60
      %p67 = scmp.eq.s32.totalorder %s22, 1
      %p68 = por %p66, %p67
      %p69 = scmp.ne.s32.totalorder %s60, %s61
      %p70 = scmp.eq.s32.totalorder %s22, 0
      %p71 = por %p69, %p70
      %p72 = scmp.ne.s32.totalorder %s60, %s61
      %p73 = scmp.eq.s32.totalorder %s23, 1
      %p74 = por %p72, %p73
      %p76 = scmp.ne.s32.totalorder %s61, %s75
      %p77 = scmp.eq.s32.totalorder %s23, 0
      %p78 = por %p76, %p77
      %s79 = ssub.s32 %s24, %s36
      %s80 = ssub.s32 %s25, %s32
      %s81 = sor.u32 %s79, %s80
      %p82 = scmp.eq.s32.totalorder %s81, 0
      %s84 = sadd.s32 %s83, 1
      %s85 = scalar_select %p82, %s83, %s84
      %p88 = pneg %p82
      %p89 = scmp.eq.s32.totalorder %s17, 1
      %p90 = por %p88, %p89
      %p91 = scmp.ne.s32.totalorder %s83, %s86
      %p92 = scmp.eq.s32.totalorder %s17, 0
      %p93 = por %p91, %p92
      %p94 = scmp.ne.s32.totalorder %s83, %s86
      %p95 = scmp.eq.s32.totalorder %s22, 1
      %p96 = por %p94, %p95
      %p97 = scmp.ne.s32.totalorder %s86, %s87
      %p98 = scmp.eq.s32.totalorder %s22, 0
      %p99 = por %p97, %p98
      %p100 = scmp.ne.s32.totalorder %s86, %s87
      %p101 = scmp.eq.s32.totalorder %s23, 1
      %p102 = por %p100, %p101
      %p104 = scmp.ne.s32.totalorder %s87, %s103
      %p105 = scmp.eq.s32.totalorder %s23, 0
      %p106 = por %p104, %p105
      %s107 = ssub.s32 %s24, %s36
      %p108 = scmp.eq.s32.totalorder %s107, 0
      %s110 = sadd.s32 %s109, 1
      %s111 = scalar_select %p108, %s109, %s110
      %p114 = pneg %p108
      %p115 = scmp.eq.s32.totalorder %s17, 1
      %p116 = por %p114, %p115
      %p117 = scmp.ne.s32.totalorder %s109, %s112
      %p118 = scmp.eq.s32.totalorder %s17, 0
      %p119 = por %p117, %p118
      %p120 = scmp.ne.s32.totalorder %s109, %s112
      %p121 = scmp.eq.s32.totalorder %s22, 1
      %p122 = por %p120, %p121
      %p123 = scmp.ne.s32.totalorder %s112, %s113
      %p124 = scmp.eq.s32.totalorder %s22, 0
      %p125 = por %p123, %p124
      %p126 = scmp.ne.s32.totalorder %s112, %s113
      %p127 = scmp.eq.s32.totalorder %s23, 1
      %p128 = por %p126, %p127
      %p130 = scmp.ne.s32.totalorder %s113, %s129
      %p131 = scmp.eq.s32.totalorder %s23, 0
      %p132 = por %p130, %p131
      %p133 = scmp.le.s32.totalorder 1, %s17
      %p134 = scmp.lt.s32.totalorder %s17, 3
      %p135 = pnand %p133, %p134
      %p136 = pneg %p135
      // Predicated region
      $region9: #{tpu_custom_call.1} parent=5 // pred_check
        _
      $region10: #{tpu_custom_call.1} parent=5 // pred_check_branch
        %138 = sbr.rel (%p135) target = $region12
      $region11: #{tpu_custom_call.1} parent=5 // pred_region
        %s139 = ssub.s32 %s17, 1
        // Predicated region
        $region13: #{tpu_custom_call.1} parent=11 // pred_check
          %p140 = pneg %p50
        $region14: #{tpu_custom_call.1} parent=11 // pred_check_branch
          %142 = sbr.rel (%p140) target = $region16
        $region15: #{tpu_custom_call.1} parent=11 // pred_region
          %144 = vsyncadd [#allocation9], 0
          %s146 = sshll.u32 %s0, 4
          %s147 = int_to_ptr.hbm [resolvable:$true] %s146
          %149 = dma.hbm_to_smem %s147, 128, [#allocation6], [#allocation9]
        $region16: #{tpu_custom_call.1} parent=11 // pred_fallthru
          _
        // Predicated region
        $region17: #{tpu_custom_call.1} parent=11 // pred_check
          %p150 = pneg %p71
        $region18: #{tpu_custom_call.1} parent=11 // pred_check_branch
          %152 = sbr.rel (%p150) target = $region20
        $region19: #{tpu_custom_call.1} parent=11 // pred_region
          _
        $region20: #{tpu_custom_call.1} parent=11 // pred_fallthru
          _
      $region12: #{tpu_custom_call.1} parent=5 // pred_fallthru
        _
      %p153 = scmp.lt.s32.totalorder %s17, 2
      // Predicated region
      $region21: #{tpu_custom_call.1} parent=5 // pred_check
        %p154 = pneg %p153
      $region22: #{tpu_custom_call.1} parent=5 // pred_check_branch
        %156 = sbr.rel (%p154) target = $region24
      $region23: #{tpu_custom_call.1} parent=5 // pred_region
        // Predicated region
        $region25: #{tpu_custom_call.1} parent=23 // pred_check
          %p157 = pneg %p93
        $region26: #{tpu_custom_call.1} parent=23 // pred_check_branch
          %159 = sbr.rel (%p157) target = $region28
        $region27: #{tpu_custom_call.1} parent=23 // pred_region
          %s160 = sand.u32 %s83, 1
          %s161 = scalar_lea.sflag [#allocation7], %s160
          %s162 = sand.u32 %s83, 1
          %s163 = smul.addr %s162, 64
          %s164 = scalar_lea.vmem [#allocation10], %s163
          %s165 = smul.u32 4, %s25
          %167 = vsyncadd %s161, 0
          %s168 = smul.addr %s165, 2
          %s169 = smul.addr %s24, 8
          %s170 = sadd.s32 %s168, %s169
          %s171 = smul.addr %s170, 8
          %s172 = scalar_lea.hbm %s2, %s171
          %s173 = sshll.u32 %s172, 4
          %s174 = int_to_ptr.hbm [resolvable:$true] %s173
          %s175 = sshll.u32 %s164, 4
          %s176 = int_to_ptr.vmem [resolvable:$true] %s175
          %181 = dma.hbm_to_vmem [thread:$0]  %s174, 1024, %s176, %s161, 128, 128, 8
        $region28: #{tpu_custom_call.1} parent=23 // pred_fallthru
          _
      $region24: #{tpu_custom_call.1} parent=5 // pred_fallthru
        _
      %p182 = scmp.le.s32.totalorder 1, %s17
      %p183 = scmp.lt.s32.totalorder %s17, 3
      %p184 = pnand %p182, %p183
      %p185 = pneg %p184
      // Predicated region
      $region29: #{tpu_custom_call.1} parent=5 // pred_check
        _
      $region30: #{tpu_custom_call.1} parent=5 // pred_check_branch
        %187 = sbr.rel (%p184) target = $region32
      $region31: #{tpu_custom_call.1} parent=5 // pred_region
        %s188 = ssub.s32 %s17, 1
        // Predicated region
        $region33: #{tpu_custom_call.1} parent=31 // pred_check
          %p189 = pneg %p50
        $region34: #{tpu_custom_call.1} parent=31 // pred_check_branch
          %191 = sbr.rel (%p189) target = $region36
        $region35: #{tpu_custom_call.1} parent=31 // pred_region
          %193 = dma.done [#allocation9], 128
        $region36: #{tpu_custom_call.1} parent=31 // pred_fallthru
          _
        %s194 = sand.u32 %s86, 1
        %s195 = scalar_lea.sflag [#allocation7], %s194
        %s196 = sand.u32 %s86, 1
        %s197 = smul.addr %s196, 64
        %s198 = scalar_lea.vmem [#allocation10], %s197
        // Predicated region
        $region37: #{tpu_custom_call.1} parent=31 // pred_check
          %p199 = pneg %p99
        $region38: #{tpu_custom_call.1} parent=31 // pred_check_branch
          %201 = sbr.rel (%p199) target = $region40
        $region39: #{tpu_custom_call.1} parent=31 // pred_region
          %203 = dma.done %s195, 1024
        $region40: #{tpu_custom_call.1} parent=31 // pred_fallthru
          _
        %204 = sfence
        %p205 = pneg %p50
        %p206 = pneg %p47
        %p207 = pneg %p71
        %p208 = pneg %p68
        %s209 = sand.u32 %s86, 1
        %s210 = scalar_lea.sflag [#allocation7], %s209
        %s211 = sand.u32 %s86, 1
        %s212 = smul.addr %s211, 64
        %s213 = scalar_lea.vmem [#allocation10], %s212
        %p214 = pneg %p99
        %p215 = pneg %p96
        %p216 = pneg %p125
        %p217 = pneg %p122
        %s218 = sand.u32 %s112, 1
        %s219 = scalar_lea.sflag [#allocation8], %s218
        %s220 = sand.u32 %s112, 1
        %s221 = smul.addr %s220, 16
        %s222 = scalar_lea.vmem [#allocation11], %s221
        %s223 = smul.u32 4, %s27
        %p224 = scmp.eq.s32.totalorder %s27, 0
        // Predicated region
        $region41: #{tpu_custom_call.1} parent=31 // pred_check
          %p225 = pneg %p224
        $region42: #{tpu_custom_call.1} parent=31 // pred_check_branch
          %227 = sbr.rel (%p225) target = $region44
        $region43: #{tpu_custom_call.1} parent=31 // pred_region
          %vm228 = vcmask 130048
          %229 = vst.msk [vmem:[#allocation2] sm:$0xff] %vm228, 0.0
          %230 = vst.msk [vmem:[#allocation2 + $0x8] sm:$0xff] %vm228, 0.0
          %231 = vst.msk [vmem:[#allocation3] sm:$0xff] %vm228, -inf
          %232 = vst.msk [vmem:[#allocation3 + $0x8] sm:$0xff] %vm228, -inf
        $region44: #{tpu_custom_call.1} parent=31 // pred_fallthru
          _
        %v233 = vld [vmem:[%s198] sm:$0xff]
        %v234 = vld [vmem:[%s198 + $0x8] sm:$0xff]
        %v235 = vld [vmem:[%s198 + $0x10] sm:$0xff]
        %v236 = vld [vmem:[%s198 + $0x18] sm:$0xff]
        %v237 = vld [vmem:[%s198 + $0x20] sm:$0xff]
        %v238 = vld [vmem:[%s198 + $0x28] sm:$0xff]
        %v239 = vld [vmem:[%s198 + $0x30] sm:$0xff]
        %v240 = vld [vmem:[%s198 + $0x38] sm:$0xff]
        %v241 = vld [vmem:[#allocation2] sm:$0xff]
        %v242 = vld [vmem:[#allocation2 + $0x8] sm:$0xff]
        %vm243 = vcmask 130048
        %v244 = vsel %vm243, %v233, 0.0
        %v245 = vsel %vm243, %v235, 0.0
        %v246 = vadd.f32 %v244, %v245
        %v247 = vsel %vm243, %v237, 0.0
        %v248 = vadd.f32 %v246, %v247
        %v249 = vsel %vm243, %v239, 0.0
        %v250 = vadd.f32 %v248, %v249
        %v251 = vsel %vm243, %v234, 0.0
        %v252 = vsel %vm243, %v236, 0.0
        %v253 = vadd.f32 %v251, %v252
        %v254 = vsel %vm243, %v238, 0.0
        %v255 = vadd.f32 %v253, %v254
        %v256 = vsel %vm243, %v240, 0.0
        %v257 = vadd.f32 %v255, %v256
        %v258 = vadd.f32 %v241, %v250
        %v259 = vadd.f32 %v242, %v257
        %260 = vst.msk [vmem:[#allocation2] sm:$0xff] %vm243, %v258
        %261 = vst.msk [vmem:[#allocation2 + $0x8] sm:$0xff] %vm243, %v259
        %v262 = vld [vmem:[#allocation3] sm:$0xff]
        %v263 = vld [vmem:[#allocation3 + $0x8] sm:$0xff]
        %v264 = vsel %vm243, %v233, -inf
        %v265 = vsel %vm243, %v235, -inf
        %v266 = vsel %vm243, %v237, -inf
        %v267 = vmax.f32 %v264, %v266
        %v268 = vsel %vm243, %v239, -inf
        %v269 = vmax.f32 %v265, %v268
        %v270 = vmax.f32 %v267, %v269
        %v271 = vsel %vm243, %v234, -inf
        %v272 = vsel %vm243, %v236, -inf
        %v273 = vsel %vm243, %v238, -inf
        %v274 = vmax.f32 %v271, %v273
        %v275 = vsel %vm243, %v240, -inf
        %v276 = vmax.f32 %v272, %v275
        %v277 = vmax.f32 %v274, %v276
        %v278 = vmax.f32 %v262, %v270
        %v279 = vmax.f32 %v263, %v277
        %280 = vst.msk [vmem:[#allocation3] sm:$0xff] %vm243, %v278
        %281 = vst.msk [vmem:[#allocation3 + $0x8] sm:$0xff] %vm243, %v279
        // Predicated region
        $region45: #{tpu_custom_call.1} parent=31 // pred_check
          %p282 = pneg %p224
        $region46: #{tpu_custom_call.1} parent=31 // pred_check_branch
          %284 = sbr.rel (%p282) target = $region48
        $region47: #{tpu_custom_call.1} parent=31 // pred_region
          %v285 = vld [vmem:[#allocation2] sm:$0xff]
          %v286 = vld [vmem:[#allocation2 + $0x8] sm:$0xff]
          %v287 = vmul.f32 %v285, 0.25
          %v288 = vmul.f32 %v286, 0.25
          %v289 = vld [vmem:[#allocation3] sm:$0xff]
          %v290 = vld [vmem:[#allocation3 + $0x8] sm:$0xff]
          %v291 = vadd.f32 %v287, %v289
          %v292 = vadd.f32 %v288, %v290
          %293 = vst [vmem:[#allocation4] sm:$0xff] 0.0
          %294 = vst [vmem:[#allocation4 + $0x8] sm:$0xff] 0.0
          %295 = vst [vmem:[#allocation4 + $0x10] sm:$0xff] 0.0
          %298 = vrot.lane.b32.xlu0 %v291, 2
          %v299 = vpop.permute.xlu0 %298
          %300 = vrot.lane.b32.xlu0 %v292, 2
          %v301 = vpop.permute.xlu0 %300
          %vm304 = vcmask 146448
          %305 = vst.msk [vmem:[#allocation4 + $0x2] sm:$0xff] %vm304, %v299
          %306 = vst.msk [vmem:[#allocation4 + $0xa] sm:$0xff] %vm304, %v301
          %v307 = vld [vmem:[#allocation4] sm:$0xff]
          %v308 = vld [vmem:[#allocation4 + $0x8] sm:$0xff]
          %v309 = vld [vmem:[#allocation4 + $0x10] sm:$0xff]
          %s310 = sld [smem:[#allocation6]]
          %v311 = vstv %s310
          %v312 = vmul.f32 %v311, %v307
          %v313 = vmul.f32 %v311, %v308
          %s314 = sld [smem:[#allocation6 + $0x80]]
          %v315 = vstv %s314
          %v316 = vmul.f32 %v315, %v307
          %v317 = vmul.f32 %v315, %v308
          %v318 = vmul.f32 %v315, %v309
          %vm322 = vcmask 1046528
          %v323 = vrot.slane %v316, 1
          %v324 = vrot.slane %v317, 1
          %v325 = vsel %vm322, %v323, %v324
          %v326 = vrot.slane %v318, 1
          %v327 = vsel %vm322, %v324, %v326
          %v330 = vadd.f32 %v312, %v325
          %v331 = vadd.f32 %v313, %v327
          %s332 = sld [smem:[#allocation6 + $0x100]]
          %v333 = vstv %s332
          %v334 = vmul.f32 %v333, %v307
          %v335 = vmul.f32 %v333, %v308
          %v336 = vmul.f32 %v333, %v309
          %vm340 = vcmask 1045504
          %v341 = vrot.slane %v334, 2
          %v342 = vrot.slane %v335, 2
          %v343 = vsel %vm340, %v341, %v342
          %v344 = vrot.slane %v336, 2
          %v345 = vsel %vm340, %v342, %v344
          %v348 = vadd.f32 %v330, %v343
          %v349 = vadd.f32 %v331, %v345
          %s350 = sld [smem:[#allocation6 + $0x180]]
          %v351 = vstv %s350
          %v352 = vmul.f32 %v351, %v307
          %v353 = vmul.f32 %v351, %v308
          %v354 = vmul.f32 %v351, %v309
          %vm358 = vcmask 1044480
          %v359 = vrot.slane %v352, 3
          %v360 = vrot.slane %v353, 3
          %v361 = vsel %vm358, %v359, %v360
          %v362 = vrot.slane %v354, 3
          %v363 = vsel %vm358, %v360, %v362
          %v366 = vadd.f32 %v348, %v361
          %v367 = vadd.f32 %v349, %v363
          %s368 = sld [smem:[#allocation6 + $0x200]]
          %v369 = vstv %s368
          %v370 = vmul.f32 %v369, %v307
          %v371 = vmul.f32 %v369, %v308
          %v372 = vmul.f32 %v369, %v309
          %vm376 = vcmask 1043456
          %v377 = vrot.slane %v370, 4
          %v378 = vrot.slane %v371, 4
          %v379 = vsel %vm376, %v377, %v378
          %v380 = vrot.slane %v372, 4
          %v381 = vsel %vm376, %v378, %v380
          %v384 = vadd.f32 %v366, %v379
          %v385 = vadd.f32 %v367, %v381
          %s386 = sld [smem:[#allocation6 + $0x1]]
          %v387 = vstv %s386
          %v388 = vmul.f32 %v387, %v307
          %v389 = vmul.f32 %v387, %v308
          %s390 = sld [smem:[#allocation6 + $0x81]]
          %v391 = vstv %s390
          %v392 = vmul.f32 %v391, %v307
          %v393 = vmul.f32 %v391, %v308
          %v394 = vmul.f32 %v391, %v309
          %v398 = vrot.slane %v392, 1
          %v399 = vrot.slane %v393, 1
          %v400 = vsel %vm322, %v398, %v399
          %v401 = vrot.slane %v394, 1
          %v402 = vsel %vm322, %v399, %v401
          %v405 = vadd.f32 %v388, %v400
          %v406 = vadd.f32 %v389, %v402
          %s407 = sld [smem:[#allocation6 + $0x101]]
          %v408 = vstv %s407
          %v409 = vmul.f32 %v408, %v307
          %v410 = vmul.f32 %v408, %v308
          %v411 = vmul.f32 %v408, %v309
          %v415 = vrot.slane %v409, 2
          %v416 = vrot.slane %v410, 2
          %v417 = vsel %vm340, %v415, %v416
          %v418 = vrot.slane %v411, 2
          %v419 = vsel %vm340, %v416, %v418
          %v422 = vadd.f32 %v405, %v417
          %v423 = vadd.f32 %v406, %v419
          %s424 = sld [smem:[#allocation6 + $0x181]]
          %v425 = vstv %s424
          %v426 = vmul.f32 %v425, %v307
          %v427 = vmul.f32 %v425, %v308
          %v428 = vmul.f32 %v425, %v309
          %v432 = vrot.slane %v426, 3
          %v433 = vrot.slane %v427, 3
          %v434 = vsel %vm358, %v432, %v433
          %v435 = vrot.slane %v428, 3
          %v436 = vsel %vm358, %v433, %v435
          %v439 = vadd.f32 %v422, %v434
          %v440 = vadd.f32 %v423, %v436
          %s441 = sld [smem:[#allocation6 + $0x201]]
          %v442 = vstv %s441
          %v443 = vmul.f32 %v442, %v307
          %v444 = vmul.f32 %v442, %v308
          %v445 = vmul.f32 %v442, %v309
          %v449 = vrot.slane %v443, 4
          %v450 = vrot.slane %v444, 4
          %v451 = vsel %vm376, %v449, %v450
          %v452 = vrot.slane %v445, 4
          %v453 = vsel %vm376, %v450, %v452
          %v456 = vadd.f32 %v439, %v451
          %v457 = vadd.f32 %v440, %v453
          %s458 = sld [smem:[#allocation6 + $0x2]]
          %v459 = vstv %s458
          %v460 = vmul.f32 %v459, %v307
          %v461 = vmul.f32 %v459, %v308
          %s462 = sld [smem:[#allocation6 + $0x82]]
          %v463 = vstv %s462
          %v464 = vmul.f32 %v463, %v307
          %v465 = vmul.f32 %v463, %v308
          %v466 = vmul.f32 %v463, %v309
          %v470 = vrot.slane %v464, 1
          %v471 = vrot.slane %v465, 1
          %v472 = vsel %vm322, %v470, %v471
          %v473 = vrot.slane %v466, 1
          %v474 = vsel %vm322, %v471, %v473
          %v477 = vadd.f32 %v460, %v472
          %v478 = vadd.f32 %v461, %v474
          %s479 = sld [smem:[#allocation6 + $0x102]]
          %v480 = vstv %s479
          %v481 = vmul.f32 %v480, %v307
          %v482 = vmul.f32 %v480, %v308
          %v483 = vmul.f32 %v480, %v309
          %v487 = vrot.slane %v481, 2
          %v488 = vrot.slane %v482, 2
          %v489 = vsel %vm340, %v487, %v488
          %v490 = vrot.slane %v483, 2
          %v491 = vsel %vm340, %v488, %v490
          %v494 = vadd.f32 %v477, %v489
          %v495 = vadd.f32 %v478, %v491
          %s496 = sld [smem:[#allocation6 + $0x182]]
          %v497 = vstv %s496
          %v498 = vmul.f32 %v497, %v307
          %v499 = vmul.f32 %v497, %v308
          %v500 = vmul.f32 %v497, %v309
          %v504 = vrot.slane %v498, 3
          %v505 = vrot.slane %v499, 3
          %v506 = vsel %vm358, %v504, %v505
          %v507 = vrot.slane %v500, 3
          %v508 = vsel %vm358, %v505, %v507
          %v511 = vadd.f32 %v494, %v506
          %v512 = vadd.f32 %v495, %v508
          %s513 = sld [smem:[#allocation6 + $0x202]]
          %v514 = vstv %s513
          %v515 = vmul.f32 %v514, %v307
          %v516 = vmul.f32 %v514, %v308
          %v517 = vmul.f32 %v514, %v309
          %v521 = vrot.slane %v515, 4
          %v522 = vrot.slane %v516, 4
          %v523 = vsel %vm376, %v521, %v522
          %v524 = vrot.slane %v517, 4
          %v525 = vsel %vm376, %v522, %v524
          %v528 = vadd.f32 %v511, %v523
          %v529 = vadd.f32 %v512, %v525
          %s530 = sld [smem:[#allocation6 + $0x3]]
          %v531 = vstv %s530
          %v532 = vmul.f32 %v531, %v307
          %v533 = vmul.f32 %v531, %v308
          %s534 = sld [smem:[#allocation6 + $0x83]]
          %v535 = vstv %s534
          %v536 = vmul.f32 %v535, %v307
          %v537 = vmul.f32 %v535, %v308
          %v538 = vmul.f32 %v535, %v309
          %v542 = vrot.slane %v536, 1
          %v543 = vrot.slane %v537, 1
          %v544 = vsel %vm322, %v542, %v543
          %v545 = vrot.slane %v538, 1
          %v546 = vsel %vm322, %v543, %v545
          %v549 = vadd.f32 %v532, %v544
          %v550 = vadd.f32 %v533, %v546
          %s551 = sld [smem:[#allocation6 + $0x103]]
          %v552 = vstv %s551
          %v553 = vmul.f32 %v552, %v307
          %v554 = vmul.f32 %v552, %v308
          %v555 = vmul.f32 %v552, %v309
          %v559 = vrot.slane %v553, 2
          %v560 = vrot.slane %v554, 2
          %v561 = vsel %vm340, %v559, %v560
          %v562 = vrot.slane %v555, 2
          %v563 = vsel %vm340, %v560, %v562
          %v566 = vadd.f32 %v549, %v561
          %v567 = vadd.f32 %v550, %v563
          %s568 = sld [smem:[#allocation6 + $0x183]]
          %v569 = vstv %s568
          %v570 = vmul.f32 %v569, %v307
          %v571 = vmul.f32 %v569, %v308
          %v572 = vmul.f32 %v569, %v309
          %v576 = vrot.slane %v570, 3
          %v577 = vrot.slane %v571, 3
          %v578 = vsel %vm358, %v576, %v577
          %v579 = vrot.slane %v572, 3
          %v580 = vsel %vm358, %v577, %v579
          %v583 = vadd.f32 %v566, %v578
          %v584 = vadd.f32 %v567, %v580
          %s585 = sld [smem:[#allocation6 + $0x203]]
          %v586 = vstv %s585
          %v587 = vmul.f32 %v586, %v307
          %v588 = vmul.f32 %v586, %v308
          %v589 = vmul.f32 %v586, %v309
          %v593 = vrot.slane %v587, 4
          %v594 = vrot.slane %v588, 4
          %v595 = vsel %vm376, %v593, %v594
          %v596 = vrot.slane %v589, 4
          %v597 = vsel %vm376, %v594, %v596
          %v600 = vadd.f32 %v583, %v595
          %v601 = vadd.f32 %v584, %v597
          %s602 = sld [smem:[#allocation6 + $0x4]]
          %v603 = vstv %s602
          %v604 = vmul.f32 %v603, %v307
          %v605 = vmul.f32 %v603, %v308
          %s606 = sld [smem:[#allocation6 + $0x84]]
          %v607 = vstv %s606
          %v608 = vmul.f32 %v607, %v307
          %v609 = vmul.f32 %v607, %v308
          %v610 = vmul.f32 %v607, %v309
          %v614 = vrot.slane %v608, 1
          %v615 = vrot.slane %v609, 1
          %v616 = vsel %vm322, %v614, %v615
          %v617 = vrot.slane %v610, 1
          %v618 = vsel %vm322, %v615, %v617
          %v621 = vadd.f32 %v604, %v616
          %v622 = vadd.f32 %v605, %v618
          %s623 = sld [smem:[#allocation6 + $0x104]]
          %v624 = vstv %s623
          %v625 = vmul.f32 %v624, %v307
          %v626 = vmul.f32 %v624, %v308
          %v627 = vmul.f32 %v624, %v309
          %v631 = vrot.slane %v625, 2
          %v632 = vrot.slane %v626, 2
          %v633 = vsel %vm340, %v631, %v632
          %v634 = vrot.slane %v627, 2
          %v635 = vsel %vm340, %v632, %v634
          %v638 = vadd.f32 %v621, %v633
          %v639 = vadd.f32 %v622, %v635
          %s640 = sld [smem:[#allocation6 + $0x184]]
          %v641 = vstv %s640
          %v642 = vmul.f32 %v641, %v307
          %v643 = vmul.f32 %v641, %v308
          %v644 = vmul.f32 %v641, %v309
          %v648 = vrot.slane %v642, 3
          %v649 = vrot.slane %v643, 3
          %v650 = vsel %vm358, %v648, %v649
          %v651 = vrot.slane %v644, 3
          %v652 = vsel %vm358, %v649, %v651
          %v655 = vadd.f32 %v638, %v650
          %v656 = vadd.f32 %v639, %v652
          %s657 = sld [smem:[#allocation6 + $0x204]]
          %v658 = vstv %s657
          %v659 = vmul.f32 %v658, %v307
          %v660 = vmul.f32 %v658, %v308
          %v661 = vmul.f32 %v658, %v309
          %v665 = vrot.slane %v659, 4
          %v666 = vrot.slane %v660, 4
          %v667 = vsel %vm376, %v665, %v666
          %v668 = vrot.slane %v661, 4
          %v669 = vsel %vm376, %v666, %v668
          %v672 = vadd.f32 %v655, %v667
          %v673 = vadd.f32 %v656, %v669
          %676 = vrot.lane.b32.xlu0 %v456, 127
          %v677 = vpop.permute.xlu0 %676
          %678 = vrot.lane.b32.xlu0 %v457, 127
          %v679 = vpop.permute.xlu0 %678
          %v682 = vadd.f32 %v384, %v677
          %v683 = vadd.f32 %v385, %v679
          %686 = vrot.lane.b32.xlu0 %v600, 127
          %v687 = vpop.permute.xlu0 %686
          %688 = vrot.lane.b32.xlu0 %v601, 127
          %v689 = vpop.permute.xlu0 %688
          %v692 = vadd.f32 %v528, %v687
          %v693 = vadd.f32 %v529, %v689
          %696 = vrot.lane.b32.xlu0 %v692, 126
          %v697 = vpop.permute.xlu0 %696
          %698 = vrot.lane.b32.xlu0 %v693, 126
          %v699 = vpop.permute.xlu0 %698
          %v702 = vadd.f32 %v682, %v697
          %v703 = vadd.f32 %v683, %v699
          %706 = vrot.lane.b32.xlu0 %v672, 124
          %v707 = vpop.permute.xlu0 %706
          %708 = vrot.lane.b32.xlu0 %v673, 124
          %v709 = vpop.permute.xlu0 %708
          %v712 = vadd.f32 %v702, %v707
          %v713 = vadd.f32 %v703, %v709
          %s714 = sld [smem:[#allocation5]]
          %v715 = vstv %s714
          %v716 = vadd.f32 %v712, %v715
          %v717 = vadd.f32 %v713, %v715
          %v718 = vxor.u32 %v716, 2147483648
          %v719 = vxor.u32 %v717, 2147483648
          %v720 = vmul.f32 %v718, 1.442695
          %v721 = vpow.pop %v720
          %v722 = vmul.f32 %v719, 1.442695
          %v723 = vpow.pop %v722
          %v724 = vadd.f32 %v721, 1.0
          %v725 = vadd.f32 %v723, 1.0
          %v726 = vrcp.pop %v724
          %v727 = vmul.f32 %v724, %v726
          %v728 = vsub.f32 1.0, %v727
          %v729 = vmul.f32 %v726, %v728
          %v730 = vadd.f32 %v726, %v729
          %vm731 = vweird.f32 %v724
          %vm732 = vweird.f32 %v726
          %vm733 = vmor %vm731, %vm732
          %v734 = vsel %vm733, %v726, %v730
          %v735 = vand.u32 2147483647, %v724
          %vm736 = vcmp.eq.f32.partialorder %v735, 8.507059e+37
          %v737 = vand.u32 %v724, 2147483648
          %v738 = vor.u32 1.1754944e-38, %v737
          %v739 = vsel %vm736, %v738, %v734
          %v740 = vmul.f32 1.0, %v739
          %v741 = vrcp.pop %v725
          %v742 = vmul.f32 %v725, %v741
          %v743 = vsub.f32 1.0, %v742
          %v744 = vmul.f32 %v741, %v743
          %v745 = vadd.f32 %v741, %v744
          %vm746 = vweird.f32 %v725
          %vm747 = vweird.f32 %v741
          %vm748 = vmor %vm746, %vm747
          %v749 = vsel %vm748, %v741, %v745
          %v750 = vand.u32 2147483647, %v725
          %vm751 = vcmp.eq.f32.partialorder %v750, 8.507059e+37
          %v752 = vand.u32 %v725, 2147483648
          %v753 = vor.u32 1.1754944e-38, %v752
          %v754 = vsel %vm751, %v753, %v749
          %v755 = vmul.f32 1.0, %v754
          %756 = vst.msk [vmem:[%s222] sm:$0xff] %vm243, %v740
          %757 = vst.msk [vmem:[%s222 + $0x8] sm:$0xff] %vm243, %v755
        $region48: #{tpu_custom_call.1} parent=31 // pred_fallthru
          _
        %s758 = sand.u32 %s112, 1
        %s759 = scalar_lea.sflag [#allocation8], %s758
        %s760 = sand.u32 %s112, 1
        %s761 = smul.addr %s760, 16
        %s762 = scalar_lea.vmem [#allocation11], %s761
        // Predicated region
        $region49: #{tpu_custom_call.1} parent=31 // pred_check
          %p763 = pneg %p122
        $region50: #{tpu_custom_call.1} parent=31 // pred_check_branch
          %765 = sbr.rel (%p763) target = $region52
        $region51: #{tpu_custom_call.1} parent=31 // pred_region
          %767 = vsyncadd %s759, 0
          %s768 = smul.addr %s26, 2
          %s769 = smul.addr %s768, 8
          %s770 = scalar_lea.hbm %s3, %s769
          %s771 = sshll.u32 %s762, 4
          %s772 = int_to_ptr.vmem [resolvable:$true] %s771
          %s773 = sshll.u32 %s770, 4
          %s774 = int_to_ptr.hbm [resolvable:$true] %s773
          %779 = dma.vmem_to_hbm [thread:$0]  %s772, 256, %s774, %s759, 128, 128, 8
        $region52: #{tpu_custom_call.1} parent=31 // pred_fallthru
          _
      $region32: #{tpu_custom_call.1} parent=5 // pred_fallthru
        _
      %p780 = scmp.le.s32.totalorder 2, %s17
      // Predicated region
      $region53: #{tpu_custom_call.1} parent=5 // pred_check
        %p781 = pneg %p780
      $region54: #{tpu_custom_call.1} parent=5 // pred_check_branch
        %783 = sbr.rel (%p781) target = $region56
      $region55: #{tpu_custom_call.1} parent=5 // pred_region
        %s784 = ssub.s32 %s17, 2
        // Predicated region
        $region57: #{tpu_custom_call.1} parent=55 // pred_check
          %p785 = pneg %p128
        $region58: #{tpu_custom_call.1} parent=55 // pred_check_branch
          %787 = sbr.rel (%p785) target = $region60
        $region59: #{tpu_custom_call.1} parent=55 // pred_region
          %s788 = sand.u32 %s113, 1
          %s789 = scalar_lea.sflag [#allocation8], %s788
          %s790 = sand.u32 %s113, 1
          %s791 = smul.addr %s790, 16
          %s792 = scalar_lea.vmem [#allocation11], %s791
          %794 = dma.done %s789, 256
        $region60: #{tpu_custom_call.1} parent=55 // pred_fallthru
          _
      $region56: #{tpu_custom_call.1} parent=5 // pred_fallthru
        _
    $region6: #{tpu_custom_call.1} parent=1 // loop_footer
      %s21 = sadd.s32 1, %s17
    $region7: #{tpu_custom_call.1} parent=1 // loop_footer_branch
      %16 = sbr.rel target = $region3
    $region8: #{tpu_custom_call.1} parent=1 // loop_exit
      _
    %795 = vsyncpa [#allocation7], 1
    %s796 = scalar_lea.sflag [#allocation7], 1
    %797 = vsyncpa %s796, 1
    %798 = vsyncpa [#allocation8], 1
    %s799 = scalar_lea.sflag [#allocation8], 1
    %800 = vsyncpa %s799, 1
    %801 = vsyncpa [#allocation9], 1
    %s802 = scalar_lea.sflag [#allocation9], 1
    %803 = vsyncpa %s802, 1

</llo_original>
